<compile_context>
chip_gen: v7x
topology: tpu7x:2x2x1
jax: 0.10.0
libtpu: 0.0.40
codegen_flags: <defaults>
</compile_context>

<pallas_src>
import jax
import jax.numpy as jnp
from jax.experimental import pallas as pl
from jax.experimental.pallas import tpu as pltpu

S_DIM = 3      # e.g. Pendulum-v1 observation dim
A_DIM = 1      # e.g. Pendulum-v1 action dim
HID = 100

_LANES = 128
_SUBLANES = 8

S_PAD = _SUBLANES     # padded feature lanes of x (only first S_DIM used); last
                      # block dim == full array extent, so (8,128) rule is met
HID_PAD = _LANES      # padded hidden width (100 -> 128)
HEAD_PAD = _LANES     # fused head matmul width: [mu | sigma | v | zeros]
HEAD_OUT = _SUBLANES  # narrowed output lanes actually written back

assert 2 * A_DIM + 1 <= HEAD_OUT <= HEAD_PAD
assert S_DIM <= S_PAD


def _round_up(n, m):
    return ((n + m - 1) // m) * m


def _ppo_kernel(x_ref, w1_ref, b1_ref, wh_ref, bh_ref, out_ref):
    x = x_ref[...]                                    # [TB, S_PAD]

    # fc1 on the VPU: S_DIM broadcast FMAs over a [TB, HID_PAD] tile.
    h = b1_ref[...]                                   # [1, HID_PAD] broadcasts
    for k in range(S_DIM):                            # static, unrolled
        h = h + x[:, k:k + 1] * w1_ref[k:k + 1, :]
    h = jnp.maximum(h, 0.0)                           # ReLU, [TB, HID_PAD]

    # Fused heads: one MXU matmul producing (mu, sigma, v) lane-dense.
    z = jnp.dot(h, wh_ref[...], preferred_element_type=jnp.float32) + bh_ref[...]
    z8 = z[:, :HEAD_OUT]                              # [TB, 8] (lanes 3.. are 0)

    # Per-lane activation on the narrow slice:
    #   lanes [0, A_DIM)        -> 2 * tanh          (mu)
    #   lanes [A_DIM, 2*A_DIM)  -> softplus (stable) (sigma)
    #   lane  2*A_DIM           -> identity          (v)
    #   remaining padded lanes stay zero (identity of zero).
    mu_all = 2.0 * jnp.tanh(z8)
    sp_all = jnp.maximum(z8, 0.0) + jnp.log1p(jnp.exp(-jnp.abs(z8)))
    lane = jax.lax.broadcasted_iota(jnp.int32, z8.shape, 1)
    out = jnp.where(lane < A_DIM, mu_all,
                    jnp.where(lane < 2 * A_DIM, sp_all, z8))
    out_ref[...] = out                                # single 8-lane store


def prepare_params(params):
    """Pad + fuse the raw parameters once on the host (do this at init time)."""
    w1, b1, wv, bv, wmu, bmu, ws, bs = params

    w1p = jnp.zeros((_SUBLANES, HID_PAD), jnp.float32).at[:S_DIM, :HID].set(w1)
    b1p = jnp.zeros((1, HID_PAD), jnp.float32).at[:, :HID].set(b1)

    whp = jnp.zeros((HID_PAD, HEAD_PAD), jnp.float32)
    whp = whp.at[:HID, 0:A_DIM].set(wmu)
    whp = whp.at[:HID, A_DIM:2 * A_DIM].set(ws)
    whp = whp.at[:HID, 2 * A_DIM:2 * A_DIM + 1].set(wv)

    bhp = jnp.zeros((1, HEAD_PAD), jnp.float32)
    bhp = bhp.at[:, 0:A_DIM].set(bmu)
    bhp = bhp.at[:, A_DIM:2 * A_DIM].set(bs)
    bhp = bhp.at[:, 2 * A_DIM:2 * A_DIM + 1].set(bv)

    return (w1p, b1p, whp, bhp)


def ppo_forward(x, padded_params):
    """x: [B, S_DIM] f32. Returns (mu [B,A_DIM], sigma [B,A_DIM], v [B,1])."""
    w1p, b1p, whp, bhp = padded_params
    B = x.shape[0]

    if B == 0:  # degenerate guard
        z = jnp.zeros((0, A_DIM), jnp.float32)
        return z, z, jnp.zeros((0, 1), jnp.float32)

    # Batch tiling: one block for small B; for larger rollout batches use big
    # tiles (amortize ~0.35-0.6 us/step overhead) but always >=2 blocks so the
    # "parallel" batch axis shards across both TensorCores on v7x.
    if B <= 256:
        tb = _round_up(B, _SUBLANES)
    else:
        tb = min(1024, _round_up((B + 1) // 2, _SUBLANES))
    b_pad = _round_up(B, tb)
    grid = (b_pad // tb,)

    # Cheap narrow pad (8 lanes) instead of a full 128-lane zeros+scatter.
    xp = jnp.pad(x.astype(jnp.float32),
                 ((0, b_pad - B), (0, S_PAD - S_DIM)))

    flops = 2 * b_pad * (S_DIM * HID_PAD + HID_PAD * HEAD_PAD)
    transcendentals = 3 * b_pad * HEAD_OUT            # tanh + exp + log1p
    bytes_accessed = 4 * (b_pad * S_PAD + w1p.size + b1p.size + whp.size
                          + bhp.size + b_pad * HEAD_OUT)
    cost = pl.CostEstimate(flops=flops,
                           transcendentals=transcendentals,
                           bytes_accessed=bytes_accessed)

    out = pl.pallas_call(
        _ppo_kernel,
        out_shape=jax.ShapeDtypeStruct((b_pad, HEAD_OUT), jnp.float32),
        grid=grid,
        in_specs=[
            pl.BlockSpec((tb, S_PAD), lambda i: (i, 0)),
            # Constant-index weight blocks stay VMEM-resident across steps.
            pl.BlockSpec((_SUBLANES, HID_PAD), lambda i: (0, 0)),
            pl.BlockSpec((1, HID_PAD), lambda i: (0, 0)),
            pl.BlockSpec((HID_PAD, HEAD_PAD), lambda i: (0, 0)),
            pl.BlockSpec((1, HEAD_PAD), lambda i: (0, 0)),
        ],
        out_specs=pl.BlockSpec((tb, HEAD_OUT), lambda i: (i, 0)),
        compiler_params=pltpu.CompilerParams(
            dimension_semantics=("parallel",)),
        cost_estimate=cost,
    )(xp, w1p, b1p, whp, bhp)

    mu = out[:B, 0:A_DIM]
    sigma = out[:B, A_DIM:2 * A_DIM]
    v = out[:B, 2 * A_DIM:2 * A_DIM + 1]
    return mu, sigma, v


def init_params(key):
    """Deterministic init mimicking PyTorch nn.Linear default U(-1/sqrt(fan_in), ...)."""
    def linear(key, fan_in, fan_out):
        kw, kb = jax.random.split(key)
        bound = 1.0 / jnp.sqrt(float(fan_in))
        w = jax.random.uniform(kw, (fan_in, fan_out), jnp.float32, -bound, bound)
        b = jax.random.uniform(kb, (1, fan_out), jnp.float32, -bound, bound)
        return w, b

    k1, k2, k3, k4 = jax.random.split(key, 4)
    w1, b1 = linear(k1, S_DIM, HID)
    wv, bv = linear(k2, HID, 1)
    wmu, bmu = linear(k3, HID, A_DIM)
    ws, bs = linear(k4, HID, A_DIM)
    return (w1, b1, wv, bv, wmu, bmu, ws, bs)


def ppo_forward_ref(x, params):
    """Pure-JAX reference for correctness checking."""
    w1, b1, wv, bv, wmu, bmu, ws, bs = params
    h = jnp.maximum(x @ w1 + b1, 0.0)
    v = h @ wv + bv
    mu = 2.0 * jnp.tanh(h @ wmu + bmu)
    sigma = jax.nn.softplus(h @ ws + bs)
    return mu, sigma, v


if __name__ == "__main__":
    key = jax.random.PRNGKey(0)
    kx, kp = jax.random.split(key)

    params = init_params(kp)
    padded_params = prepare_params(params)   # pad/fuse once at init

    ok = True
    for B in (8, 300):                        # small (1 block) + multi-block path
        x = jax.random.normal(jax.random.fold_in(kx, B), (B, S_DIM), jnp.float32)
        mu, sigma, v = ppo_forward(x, padded_params)
        jax.block_until_ready((mu, sigma, v))

        mu_r, sigma_r, v_r = ppo_forward_ref(x, params)
        ok &= mu.shape == (B, A_DIM) and sigma.shape == (B, A_DIM) and v.shape == (B, 1)
        ok &= bool(jnp.allclose(mu, mu_r, atol=1e-5, rtol=1e-5))
        ok &= bool(jnp.allclose(sigma, sigma_r, atol=1e-5, rtol=1e-5))
        ok &= bool(jnp.allclose(v, v_r, atol=1e-5, rtol=1e-5))

    assert ok
    print("KERNEL_OK")
</pallas_src>

<mosaic_0001>
module attributes {stable_mosaic.version = 11 : i64} {
  func.func @_ppo_kernel(%arg0: i32, %arg1: memref<8x8xf32, #tpu.memory_space<vmem>>, %arg2: memref<8x128xf32, #tpu.memory_space<vmem>>, %arg3: memref<1x128xf32, #tpu.memory_space<vmem>>, %arg4: memref<128x128xf32, #tpu.memory_space<vmem>>, %arg5: memref<1x128xf32, #tpu.memory_space<vmem>>, %arg6: memref<8x8xf32, #tpu.memory_space<vmem>>) attributes {dimension_semantics = [#tpu.dimension_semantics<parallel>], iteration_bounds = array<i64: 1>, scalar_prefetch = 0 : i64, scratch_operands = 0 : i64, tpu.core_type = #tpu.core_type<tc>, window_params = [{transform_indices = @transform_0, window_bounds = array<i64: 8, 8>}, {pipeline_mode = #tpu.pipeline_mode<synchronous>, transform_indices = @transform_1, window_bounds = array<i64: 8, 128>}, {pipeline_mode = #tpu.pipeline_mode<synchronous>, transform_indices = @transform_2, window_bounds = array<i64: 1, 128>}, {pipeline_mode = #tpu.pipeline_mode<synchronous>, transform_indices = @transform_3, window_bounds = array<i64: 128, 128>}, {pipeline_mode = #tpu.pipeline_mode<synchronous>, transform_indices = @transform_4, window_bounds = array<i64: 1, 128>}, {transform_indices = @transform_5, window_bounds = array<i64: 8, 8>}]} {
    %c0 = arith.constant 0 : index
    %c0_0 = arith.constant 0 : index
    %0 = vector.load %arg1[%c0, %c0_0] : memref<8x8xf32, #tpu.memory_space<vmem>>, vector<8x8xf32>
    %c0_1 = arith.constant 0 : index
    %c0_2 = arith.constant 0 : index
    %1 = vector.load %arg3[%c0_1, %c0_2] : memref<1x128xf32, #tpu.memory_space<vmem>>, vector<1x128xf32>
    %2 = vector.extract_strided_slice %0 {offsets = [0, 0], sizes = [8, 1], strides = [1, 1]} : vector<8x8xf32> to vector<8x1xf32>
    %c0_3 = arith.constant 0 : index
    %c0_4 = arith.constant 0 : index
    %3 = vector.load %arg2[%c0_3, %c0_4] : memref<8x128xf32, #tpu.memory_space<vmem>>, vector<1x128xf32>
    %4 = vector.broadcast %2 : vector<8x1xf32> to vector<8x128xf32>
    %5 = vector.broadcast %3 : vector<1x128xf32> to vector<8x128xf32>
    %6 = arith.mulf %4, %5 : vector<8x128xf32>
    %7 = vector.broadcast %1 : vector<1x128xf32> to vector<8x128xf32>
    %8 = arith.addf %7, %6 : vector<8x128xf32>
    %9 = vector.extract_strided_slice %0 {offsets = [0, 1], sizes = [8, 1], strides = [1, 1]} : vector<8x8xf32> to vector<8x1xf32>
    %c1 = arith.constant 1 : index
    %c0_5 = arith.constant 0 : index
    %10 = vector.load %arg2[%c1, %c0_5] : memref<8x128xf32, #tpu.memory_space<vmem>>, vector<1x128xf32>
    %11 = vector.broadcast %9 : vector<8x1xf32> to vector<8x128xf32>
    %12 = vector.broadcast %10 : vector<1x128xf32> to vector<8x128xf32>
    %13 = arith.mulf %11, %12 : vector<8x128xf32>
    %14 = arith.addf %8, %13 : vector<8x128xf32>
    %15 = vector.extract_strided_slice %0 {offsets = [0, 2], sizes = [8, 1], strides = [1, 1]} : vector<8x8xf32> to vector<8x1xf32>
    %c2 = arith.constant 2 : index
    %c0_6 = arith.constant 0 : index
    %16 = vector.load %arg2[%c2, %c0_6] : memref<8x128xf32, #tpu.memory_space<vmem>>, vector<1x128xf32>
    %17 = vector.broadcast %15 : vector<8x1xf32> to vector<8x128xf32>
    %18 = vector.broadcast %16 : vector<1x128xf32> to vector<8x128xf32>
    %19 = arith.mulf %17, %18 : vector<8x128xf32>
    %20 = arith.addf %14, %19 : vector<8x128xf32>
    %cst = arith.constant 0.000000e+00 : f32
    %21 = vector.broadcast %cst : f32 to vector<8x128xf32>
    %22 = arith.maximumf %20, %21 : vector<8x128xf32>
    %c0_7 = arith.constant 0 : index
    %c0_8 = arith.constant 0 : index
    %23 = vector.load %arg4[%c0_7, %c0_8] : memref<128x128xf32, #tpu.memory_space<vmem>>, vector<128x128xf32>
    %cst_9 = arith.constant dense<0.000000e+00> : vector<8x128xf32>
    %24 = tpu.matmul %22, %23, %cst_9 {dimension_numbers = #tpu.dot_dimension_numbers<[1], [0], [0], [1], [0, 0, 1, 1], [], []>} : vector<8x128xf32>, vector<128x128xf32>, vector<8x128xf32> -> vector<8x128xf32>
    %c0_10 = arith.constant 0 : index
    %c0_11 = arith.constant 0 : index
    %25 = vector.load %arg5[%c0_10, %c0_11] : memref<1x128xf32, #tpu.memory_space<vmem>>, vector<1x128xf32>
    %26 = vector.broadcast %25 : vector<1x128xf32> to vector<8x128xf32>
    %27 = arith.addf %24, %26 : vector<8x128xf32>
    %28 = vector.extract_strided_slice %27 {offsets = [0, 0], sizes = [8, 8], strides = [1, 1]} : vector<8x128xf32> to vector<8x8xf32>
    %29 = math.tanh %28 : vector<8x8xf32>
    %cst_12 = arith.constant 2.000000e+00 : f32
    %30 = vector.broadcast %cst_12 : f32 to vector<8x8xf32>
    %31 = arith.mulf %30, %29 : vector<8x8xf32>
    %cst_13 = arith.constant 0.000000e+00 : f32
    %32 = vector.broadcast %cst_13 : f32 to vector<8x8xf32>
    %33 = arith.maximumf %28, %32 : vector<8x8xf32>
    %34 = math.absf %28 : vector<8x8xf32>
    %cst_14 = arith.constant 0.000000e+00 : f32
    %35 = vector.broadcast %cst_14 : f32 to vector<8x8xf32>
    %36 = arith.subf %35, %34 : vector<8x8xf32>
    %37 = math.exp %36 : vector<8x8xf32>
    %38 = math.log1p %37 : vector<8x8xf32>
    %39 = arith.addf %33, %38 : vector<8x8xf32>
    %40 = tpu.iota {dimensions = array<i32: 1>} : vector<8x8xi32>
    %c1_i32 = arith.constant 1 : i32
    %41 = vector.broadcast %c1_i32 : i32 to vector<8x8xi32>
    %42 = arith.cmpi slt, %40, %41 : vector<8x8xi32>
    %c2_i32 = arith.constant 2 : i32
    %43 = vector.broadcast %c2_i32 : i32 to vector<8x8xi32>
    %44 = arith.cmpi slt, %40, %43 : vector<8x8xi32>
    %45 = arith.select %44, %39, %28 : vector<8x8xi1>, vector<8x8xf32>
    %46 = arith.select %42, %31, %45 : vector<8x8xi1>, vector<8x8xf32>
    %c0_15 = arith.constant 0 : index
    %c0_16 = arith.constant 0 : index
    %47 = vector.load %arg6[%c0_15, %c0_16] : memref<8x8xf32, #tpu.memory_space<vmem>>, vector<8x8xf32>
    tpu.vector_store %arg6[%c0_15, %c0_16], %46 {strides = array<i32>} : memref<8x8xf32, #tpu.memory_space<vmem>>, vector<8x8xf32>,
    return
  }
  func.func @transform_0(%arg0: i32) -> (i32, i32) {
    %c0_i32 = arith.constant 0 : i32
    %c0_i32_0 = arith.constant 0 : i32
    return %arg0, %c0_i32 : i32, i32
  }
  func.func @transform_1(%arg0: i32) -> (i32, i32) {
    %c0_i32 = arith.constant 0 : i32
    %c0_i32_0 = arith.constant 0 : i32
    %c0_i32_1 = arith.constant 0 : i32
    return %c0_i32, %c0_i32_0 : i32, i32
  }
  func.func @transform_2(%arg0: i32) -> (i32, i32) {
    %c0_i32 = arith.constant 0 : i32
    %c0_i32_0 = arith.constant 0 : i32
    %c0_i32_1 = arith.constant 0 : i32
    return %c0_i32, %c0_i32_0 : i32, i32
  }
  func.func @transform_3(%arg0: i32) -> (i32, i32) {
    %c0_i32 = arith.constant 0 : i32
    %c0_i32_0 = arith.constant 0 : i32
    %c0_i32_1 = arith.constant 0 : i32
    return %c0_i32, %c0_i32_0 : i32, i32
  }
  func.func @transform_4(%arg0: i32) -> (i32, i32) {
    %c0_i32 = arith.constant 0 : i32
    %c0_i32_0 = arith.constant 0 : i32
    %c0_i32_1 = arith.constant 0 : i32
    return %c0_i32, %c0_i32_0 : i32, i32
  }
  func.func @transform_5(%arg0: i32) -> (i32, i32) {
    %c0_i32 = arith.constant 0 : i32
    %c0_i32_0 = arith.constant 0 : i32
    return %arg0, %c0_i32 : i32, i32
  }
}

</mosaic_0001>

<llo_original>
// kernel: tpu_custom_call.1
$region0: #{tpu_custom_call.1}
  #allocation0 [shape = 'u32[]', space=smem, size = 0x4, offset = 0x4, fixed_abs, tag = 'smem constant byte address 0x4 - core index']
  #allocation1 [shape = 'u32[144,128]{1,0:T(1,128)}', space=vmem, size = 0x12000, scoped, tag = 'internal scratch']
  %s0 = inlined_call_operand.hbm [shape: f32[8,8], index: 0, kind: input, shape index: {}]
  %s1 = inlined_call_operand.hbm [shape: f32[8,128], index: 1, kind: input, shape index: {}]
  %s2 = inlined_call_operand.vmem [shape: f32[1,128], index: 2, kind: input, shape index: {}]
  %s3 = inlined_call_operand.hbm [shape: f32[128,128], index: 3, kind: input, shape index: {}]
  %s4 = inlined_call_operand.vmem [shape: f32[1,128], index: 4, kind: input, shape index: {}]
  %s5 = inlined_call_operand.hbm [shape: f32[8,8], index: 5, kind: output, shape index: {}]
  %s6 = sld [smem:[#allocation0]]
  $region42: #{tpu_custom_call.1} parent=0
    _
  %s8 = ssub.s32 1, %s6
  %s9 = scalar_select 0, %s8, %s6
  $region1: #{tpu_custom_call.1} parent=0
    #allocation2 [shape = 'u8[4096]{0}', space=vmem, size = 0x1000, scoped, tag = 'input window, operand 0, single buffered']
    #allocation3 [shape = 's32[1]{0}', space=sflag, size = 0x4, scoped, tag = 'scoped memory for tpu_custom_call.1']
    #allocation4 [shape = 's32[1]{0}', space=sflag, size = 0x4, scoped, tag = 'scoped memory for tpu_custom_call.1']
    #allocation5 [shape = 'u8[4096]{0}', space=vmem, size = 0x1000, scoped, tag = 'input window, operand 1, single buffered']
    #allocation6 [shape = 's32[1]{0}', space=sflag, size = 0x4, scoped, tag = 'scoped memory for tpu_custom_call.1']
    #allocation7 [shape = 'u8[65536]{0}', space=vmem, size = 0x10000, scoped, tag = 'input window, operand 3, single buffered']
    #allocation8 [shape = 'u8[4096]{0}', space=vmem, size = 0x1000, scoped, tag = 'output window, operand 0, single buffered']
    %10 = vsyncpa [#allocation3], 0
    %11 = vsyncpa [#allocation6], 0
    %12 = vsyncpa [#allocation4], 0
    // Predicated region
    $region2: #{tpu_custom_call.1} parent=1 // pred_check
      _
    $region3: #{tpu_custom_call.1} parent=1 // pred_check_branch
      %14 = sbr.rel (0) target = $region5
    $region4: #{tpu_custom_call.1} parent=1 // pred_region
      %s16 = ssub.s32 128, 128
      %17 = vsyncadd [#allocation3], %s16
      %s19 = sshll.u32 [#allocation2], 4
      %s20 = int_to_ptr.vmem [resolvable:$true] %s19
      %22 = dma.hbm_to_vmem [thread:$0]  %s0, 128, %s20, [#allocation3]
    $region5: #{tpu_custom_call.1} parent=1 // pred_fallthru
      _
    // Predicated region
    $region6: #{tpu_custom_call.1} parent=1 // pred_check
      _
    $region7: #{tpu_custom_call.1} parent=1 // pred_check_branch
      %24 = sbr.rel (0) target = $region9
    $region8: #{tpu_custom_call.1} parent=1 // pred_region
      %s26 = ssub.s32 128, 128
      %27 = vsyncadd [#allocation6], %s26
      %s29 = sshll.u32 [#allocation5], 4
      %s30 = int_to_ptr.vmem [resolvable:$true] %s29
      %32 = dma.hbm_to_vmem [thread:$0]  %s1, 128, %s30, [#allocation6]
    $region9: #{tpu_custom_call.1} parent=1 // pred_fallthru
      _
    // Predicated region
    $region10: #{tpu_custom_call.1} parent=1 // pred_check
      _
    $region11: #{tpu_custom_call.1} parent=1 // pred_check_branch
      %34 = sbr.rel (0) target = $region13
    $region12: #{tpu_custom_call.1} parent=1 // pred_region
      _
    $region13: #{tpu_custom_call.1} parent=1 // pred_fallthru
      _
    // Predicated region
    $region14: #{tpu_custom_call.1} parent=1 // pred_check
      _
    $region15: #{tpu_custom_call.1} parent=1 // pred_check_branch
      %36 = sbr.rel (0) target = $region17
    $region16: #{tpu_custom_call.1} parent=1 // pred_region
      %s38 = ssub.s32 2048, 2048
      %39 = vsyncadd [#allocation6], %s38
      %s40 = sshll.u32 [#allocation7], 4
      %s41 = int_to_ptr.vmem [resolvable:$true] %s40
      %46 = dma.hbm_to_vmem [thread:$0]  %s3, 2048, %s41, [#allocation6], 128, 128, 8
    $region17: #{tpu_custom_call.1} parent=1 // pred_fallthru
      _
    // Predicated region
    $region18: #{tpu_custom_call.1} parent=1 // pred_check
      _
    $region19: #{tpu_custom_call.1} parent=1 // pred_check_branch
      %48 = sbr.rel (0) target = $region21
    $region20: #{tpu_custom_call.1} parent=1 // pred_region
      _
    $region21: #{tpu_custom_call.1} parent=1 // pred_fallthru
      _
    // Predicated region
    $region22: #{tpu_custom_call.1} parent=1 // pred_check
      _
    $region23: #{tpu_custom_call.1} parent=1 // pred_check_branch
      %50 = sbr.rel (0) target = $region25
    $region24: #{tpu_custom_call.1} parent=1 // pred_region
      %51 = dma.done [#allocation3], 128
    $region25: #{tpu_custom_call.1} parent=1 // pred_fallthru
      _
    // Predicated region
    $region26: #{tpu_custom_call.1} parent=1 // pred_check
      _
    $region27: #{tpu_custom_call.1} parent=1 // pred_check_branch
      %53 = sbr.rel (0) target = $region29
    $region28: #{tpu_custom_call.1} parent=1 // pred_region
      %54 = dma.done [#allocation6], 128
    $region29: #{tpu_custom_call.1} parent=1 // pred_fallthru
      _
    // Predicated region
    $region30: #{tpu_custom_call.1} parent=1 // pred_check
      _
    $region31: #{tpu_custom_call.1} parent=1 // pred_check_branch
      %56 = sbr.rel (0) target = $region33
    $region32: #{tpu_custom_call.1} parent=1 // pred_region
      %57 = dma.done [#allocation6], 2048
    $region33: #{tpu_custom_call.1} parent=1 // pred_fallthru
      _
    %v58 = vld [vmem:[#allocation2] sm:$0xff]
    %v59 = vld [vmem:[%s2] sm:$0x1]
    %v60 = vld [vmem:[#allocation5] sm:$0x1]
    %62 = vset.pattern.permute.xlu0 0
    %63 = vperm.xlu0 %62, %v58
    %v64 = vpop.permute.xlu0 %63
    %v66 = vlaneseq
    %v67 = vshrl.u32 %v66, 7
    %v68 = vsub.s32 0, %v67
    %v69 = vrot.slane %v60, %v68
    %v70 = vmul.f32 %v64, %v69
    %v72 = vlaneseq
    %v73 = vshrl.u32 %v72, 7
    %v74 = vsub.s32 0, %v73
    %v75 = vrot.slane %v59, %v74
    %v77 = vadd.f32 %v75, %v70
    %v78 = vld [vmem:[#allocation5 + $0x1] sm:$0x1]
    %79 = vset.pattern.permute.xlu0 1
    %80 = vperm.xlu0 %79, %v58
    %v81 = vpop.permute.xlu0 %80
    %v83 = vlaneseq
    %v84 = vshrl.u32 %v83, 7
    %v85 = vsub.s32 0, %v84
    %v86 = vrot.slane %v78, %v85
    %v87 = vmul.f32 %v81, %v86
    %v88 = vadd.f32 %v77, %v87
    %v89 = vld [vmem:[#allocation5 + $0x2] sm:$0x1]
    %90 = vset.pattern.permute.xlu0 2
    %91 = vperm.xlu0 %90, %v58
    %v92 = vpop.permute.xlu0 %91
    %v94 = vlaneseq
    %v95 = vshrl.u32 %v94, 7
    %v96 = vsub.s32 0, %v95
    %v97 = vrot.slane %v89, %v96
    %v98 = vmul.f32 %v92, %v97
    %v99 = vadd.f32 %v88, %v98
    %v100 = vmax.f32 %v99, 0.0
    %v101 = vld [vmem:[#allocation7] sm:$0xff]
    %v102 = vld [vmem:[#allocation7 + $0x8] sm:$0xff]
    %v103 = vld [vmem:[#allocation7 + $0x10] sm:$0xff]
    %v104 = vld [vmem:[#allocation7 + $0x18] sm:$0xff]
    %v105 = vld [vmem:[#allocation7 + $0x20] sm:$0xff]
    %v106 = vld [vmem:[#allocation7 + $0x28] sm:$0xff]
    %v107 = vld [vmem:[#allocation7 + $0x30] sm:$0xff]
    %v108 = vld [vmem:[#allocation7 + $0x38] sm:$0xff]
    %v109 = vld [vmem:[#allocation7 + $0x40] sm:$0xff]
    %v110 = vld [vmem:[#allocation7 + $0x48] sm:$0xff]
    %v111 = vld [vmem:[#allocation7 + $0x50] sm:$0xff]
    %v112 = vld [vmem:[#allocation7 + $0x58] sm:$0xff]
    %v113 = vld [vmem:[#allocation7 + $0x60] sm:$0xff]
    %v114 = vld [vmem:[#allocation7 + $0x68] sm:$0xff]
    %v115 = vld [vmem:[#allocation7 + $0x70] sm:$0xff]
    %v116 = vld [vmem:[#allocation7 + $0x78] sm:$0xff]
    %v117 = vld [vmem:[%s4] sm:$0x1]
    %v119 = vlaneseq
    %v120 = vshrl.u32 %v119, 7
    %v121 = vsub.s32 0, %v120
    %v122 = vrot.slane %v117, %v121
    %124 = vmatprep.subr.mxu0 0.0
    %125 = vmatpush1.msra.mxu0 %v101
    %126 = vmatprep.subr.mxu0 0.0
    %127 = vmatpush1.msra.mxu0 %v102
    %128 = vmatprep.subr.mxu0 0.0
    %129 = vmatpush1.msra.mxu0 %v103
    %130 = vmatprep.subr.mxu0 0.0
    %131 = vmatpush1.msra.mxu0 %v104
    %132 = vmatprep.subr.mxu0 0.0
    %133 = vmatpush1.msra.mxu0 %v105
    %134 = vmatprep.subr.mxu0 0.0
    %135 = vmatpush1.msra.mxu0 %v106
    %136 = vmatprep.subr.mxu0 0.0
    %137 = vmatpush1.msra.mxu0 %v107
    %138 = vmatprep.subr.mxu0 0.0
    %139 = vmatpush1.msra.mxu0 %v108
    %140 = vmatprep.subr.mxu0 0.0
    %141 = vmatpush1.msra.mxu0 %v109
    %142 = vmatprep.subr.mxu0 0.0
    %143 = vmatpush1.msra.mxu0 %v110
    %144 = vmatprep.subr.mxu0 0.0
    %145 = vmatpush1.msra.mxu0 %v111
    %146 = vmatprep.subr.mxu0 0.0
    %147 = vmatpush1.msra.mxu0 %v112
    %148 = vmatprep.subr.mxu0 0.0
    %149 = vmatpush1.msra.mxu0 %v113
    %150 = vmatprep.subr.mxu0 0.0
    %151 = vmatpush1.msra.mxu0 %v114
    %152 = vmatprep.subr.mxu0 0.0
    %153 = vmatpush1.msra.mxu0 %v115
    %154 = vmatprep.subr.mxu0 0.0
    %155 = vmatpush1.msra.mxu0 %v116
    %156 = vmatprep.subr.mxu0 0.0
    %157 = vmatpush1.msra.mxu0 0.0
    %158 = vmatprep.subr.mxu0 0.0
    %159 = vmatpush1.msra.mxu0 0.0
    %160 = vmatprep.subr.mxu0 0.0
    %161 = vmatpush1.msra.mxu0 0.0
    %162 = vmatprep.subr.mxu0 0.0
    %163 = vmatpush1.msra.mxu0 0.0
    %164 = vmatprep.subr.mxu0 0.0
    %165 = vmatpush1.msra.mxu0 0.0
    %166 = vmatprep.subr.mxu0 0.0
    %167 = vmatpush1.msra.mxu0 0.0
    %168 = vmatprep.subr.mxu0 0.0
    %169 = vmatpush1.msra.mxu0 0.0
    %170 = vmatprep.subr.mxu0 0.0
    %171 = vmatpush1.msra.mxu0 0.0
    %172 = vmatprep.subr.mxu0 0.0
    %173 = vmatpush1.msra.mxu0 0.0
    %174 = vmatprep.subr.mxu0 0.0
    %175 = vmatpush1.msra.mxu0 0.0
    %176 = vmatprep.subr.mxu0 0.0
    %177 = vmatpush1.msra.mxu0 0.0
    %178 = vmatprep.subr.mxu0 0.0
    %179 = vmatpush1.msra.mxu0 0.0
    %180 = vmatprep.subr.mxu0 0.0
    %181 = vmatpush1.msra.mxu0 0.0
    %182 = vmatprep.subr.mxu0 0.0
    %183 = vmatpush1.msra.mxu0 0.0
    %184 = vmatprep.subr.mxu0 0.0
    %185 = vmatpush1.msra.mxu0 0.0
    %186 = vmatprep.subr.mxu0 0.0
    %187 = vmatpush1.msra.mxu0 0.0
    %188 = vmatprep.mubr.f32.mxu0 0.0
    %189 = vmatmul.mubr.f32.gmra.mrb[0].mxu0 %v100
    %v190 = vpop.f32.mrb[0].mxu0
    %v191 = vadd.f32 %v122, %v190
    %v192 = vpop.f32.mrb[0].mxu0
    %193 = vdwg.mxu0
    %v194 = vtanh.pop %v191
    %v195 = vmul.f32 %v194, 2.0
    %v196 = vmax.f32 %v191, 0.0
    %v197 = vand.u32 2147483647, %v191
    %v198 = vsub.f32 0.0, %v197
    %v199 = vmul.f32 %v198, 1.442695
    %v200 = vpow.pop %v199
    %v201 = vadd.f32 %v200, 1.0
    %v202 = vlog2.pop %v201
    %v203 = vmul.f32 %v202, 0.6931472
    %v204 = vmul.f32 -0.5, %v200
    %v205 = vadd.f32 %v204, 1.0
    %v206 = vmul.f32 %v205, %v200
    %v207 = vand.u32 2147483647, %v200
    %vm208 = vcmp.lt.f32.partialorder %v207, 0.0004427343
    %v209 = vsel %vm208, %v206, %v203
    %v210 = vadd.f32 %v196, %v209
    %v211 = vlaneseq
    %v212 = vand.u32 %v211, 127
    %vm213 = vcmp.lt.s32.totalorder %v212, 1
    %vm214 = vcmp.lt.s32.totalorder %v212, 2
    %v215 = vsel %vm214, %v210, %v191
    %v216 = vsel %vm213, %v195, %v215
    %vm217 = vcmask 64512
    %218 = vst.msk [vmem:[#allocation8] sm:$0xff] %vm217, %v216
    // Predicated region
    $region34: #{tpu_custom_call.1} parent=1 // pred_check
      _
    $region35: #{tpu_custom_call.1} parent=1 // pred_check_branch
      %220 = sbr.rel (0) target = $region37
    $region36: #{tpu_custom_call.1} parent=1 // pred_region
      %s222 = ssub.s32 128, 128
      %223 = vsyncadd [#allocation4], %s222
      %s225 = sshll.u32 [#allocation8], 4
      %s226 = int_to_ptr.vmem [resolvable:$true] %s225
      %228 = dma.vmem_to_hbm [thread:$0]  %s226, 128, %s5, [#allocation4]
    $region37: #{tpu_custom_call.1} parent=1 // pred_fallthru
      _
    // Predicated region
    $region38: #{tpu_custom_call.1} parent=1 // pred_check
      _
    $region39: #{tpu_custom_call.1} parent=1 // pred_check_branch
      %230 = sbr.rel (0) target = $region41
    $region40: #{tpu_custom_call.1} parent=1 // pred_region
      %231 = dma.done [#allocation4], 128
    $region41: #{tpu_custom_call.1} parent=1 // pred_fallthru
      _
    %232 = vsyncpa [#allocation3], 1
    %233 = vsyncpa [#allocation6], 1
    %234 = vsyncpa [#allocation4], 1

</llo_original>
